<compile_context>
chip_gen: v5e
topology: v5e:2x2
jax: 0.10.0
libtpu: 0.0.40
codegen_flags: <defaults>
</compile_context>

<pallas_src>
import functools

import jax
import jax.numpy as jnp
from jax.experimental import pallas as pl
from jax.experimental.pallas import tpu as pltpu


def _round_up(n, m):
    return ((n + m - 1) // m) * m


def _network_u_kernel(x_ref, w1_ref, b1_ref, w2_ref, b2_ref, phi_ref, y_ref, *,
                      compute_dtype):
    d = phi_ref.shape[-1]                      # = dim (static)
    xv = x_ref[...]
    if xv.dtype != compute_dtype:              # no-op when x already bf16/f32
        xv = xv.astype(compute_dtype)
    # h = relu(x @ W1^T + b1); MXU accumulates in f32, epilogue in f32.
    h = jnp.dot(xv, w1_ref[...], preferred_element_type=jnp.float32)
    h = jnp.maximum(h + b1_ref[...], 0.0)
    # Fused heads: W2_cat = [W_phi^T | W_y^T]  ->  out[:, :d]=phi, out[:, d]=y.
    out = jnp.dot(h.astype(compute_dtype), w2_ref[...],
                  preferred_element_type=jnp.float32)
    out = out + b2_ref[...]
    phi_ref[...] = out[:, :d].astype(phi_ref.dtype)
    y_ref[...] = out[:, d:d + 1].astype(y_ref.dtype)


def prepare_params(params, weights_dtype=jnp.bfloat16):
    """One-time weight prep: transpose, fuse phi/y heads, pad hidden to 128.

    params follow the PyTorch convention:
        w1 [hidden, dim], b1 [hidden]
        wphi [dim, hidden], bphi [dim]
        wy [1, hidden], by [1]
    weights_dtype MUST match the compute_dtype passed to network_u_forward.
    """
    w1, b1 = params["w1"], params["b1"]
    wphi, bphi = params["wphi"], params["bphi"]
    wy, by = params["wy"], params["by"]
    hidden, dim = w1.shape

    hidden_p = _round_up(hidden, 128)          # lane-aligned K (exact: zero pad)
    dh = hidden_p - hidden

    w1_t = jnp.pad(w1.T, ((0, 0), (0, dh)))                     # [dim, hidden_p]
    b1_p = jnp.pad(b1, (0, dh)).reshape(1, hidden_p)            # [1, hidden_p]
    w2_cat = jnp.concatenate([wphi.T, wy.T], axis=1)            # [hidden, dim+1]
    w2_cat = jnp.pad(w2_cat, ((0, dh), (0, 0)))                 # [hidden_p, dim+1]
    b2_cat = jnp.concatenate([bphi, by], axis=0).reshape(1, dim + 1)

    return {
        "w1_t": w1_t.astype(weights_dtype),
        "b1": b1_p.astype(jnp.float32),
        "w2_cat": w2_cat.astype(weights_dtype),
        "b2_cat": b2_cat.astype(jnp.float32),
    }


@functools.partial(jax.jit, static_argnames=("compute_dtype", "block_b"))
def network_u_forward(x, prepared, compute_dtype=jnp.bfloat16, block_b=1024):
    """Forward pass: returns (phi_x [B, dim] f32, y_pred [B, 1] f32).

    compute_dtype controls the MXU operand dtype (bf16 recommended on
    v6e/v7x; valid on v5e too — only the f32 epilogue touches the VPU).
    In the bf16 path x is cast to bf16 before the first matmul, so activation
    precision follows compute_dtype; pass f32 everywhere for f32 fidelity.
    """
    w1_t, b1 = prepared["w1_t"], prepared["b1"]
    w2, b2 = prepared["w2_cat"], prepared["b2_cat"]
    if w1_t.dtype != compute_dtype or w2.dtype != compute_dtype:
        raise ValueError(
            f"prepare_params weights_dtype ({w1_t.dtype}) must equal "
            f"compute_dtype ({compute_dtype}); re-run prepare_params.")

    B = x.shape[0]
    dim, hidden_p = w1_t.shape
    out_cat = w2.shape[1]                      # dim + 1

    # Balanced batch tiles; >=2 tiles when possible so ("parallel",) feeds
    # both v7x TensorCores.  tb is a multiple of 8 (sublane constraint).
    num_tiles = max(pl.cdiv(B, block_b), 1)
    if num_tiles == 1 and B >= 16:
        num_tiles = 2
    tb = _round_up(pl.cdiv(B, num_tiles), 8)
    b_pad = tb * num_tiles
    if b_pad != B:
        x = jnp.pad(x, ((0, b_pad - B), (0, 0)))

    # Advisory cost + explicit scoped-VMEM limit (v5e default is only 16 MiB).
    flops = 2 * b_pad * hidden_p * (dim + out_cat)
    bytes_accessed = (
        b_pad * dim * x.dtype.itemsize                       # x read
        + w1_t.size * w1_t.dtype.itemsize + w2.size * w2.dtype.itemsize
        + (b1.size + b2.size) * 4
        + b_pad * out_cat * 4)                               # phi + y write
    vmem_need = 2 * (tb * dim * x.dtype.itemsize             # x (double-buffered)
                     + tb * out_cat * 4                      # phi + y tiles
                     + w1_t.size * w1_t.dtype.itemsize
                     + w2.size * w2.dtype.itemsize
                     + (b1.size + b2.size) * 4)
    vmem_limit = int(min(64 << 20, max(32 << 20, 2 * vmem_need)))

    phi, y = pl.pallas_call(
        functools.partial(_network_u_kernel, compute_dtype=compute_dtype),
        out_shape=(jax.ShapeDtypeStruct((b_pad, dim), jnp.float32),
                   jax.ShapeDtypeStruct((b_pad, 1), jnp.float32)),
        grid=(num_tiles,),
        in_specs=[
            pl.BlockSpec((tb, dim), lambda i: (i, 0)),          # x tile (pipelined)
            pl.BlockSpec((dim, hidden_p), lambda i: (0, 0)),    # W1^T (resident)
            pl.BlockSpec((1, hidden_p), lambda i: (0, 0)),      # b1
            pl.BlockSpec((hidden_p, out_cat), lambda i: (0, 0)),  # fused W2
            pl.BlockSpec((1, out_cat), lambda i: (0, 0)),       # fused bias
        ],
        out_specs=(pl.BlockSpec((tb, dim), lambda i: (i, 0)),   # phi (unpadded)
                   pl.BlockSpec((tb, 1), lambda i: (i, 0))),    # y   (unpadded)
        compiler_params=pltpu.CompilerParams(
            dimension_semantics=("parallel",),
            vmem_limit_bytes=vmem_limit),
        cost_estimate=pl.CostEstimate(flops=flops, transcendentals=0,
                                      bytes_accessed=bytes_accessed),
    )(x, w1_t, b1, w2, b2)

    if b_pad != B:            # only slice when batch padding was actually added
        phi = phi[:B]
        y = y[:B]
    return phi, y


def init_params(key, dim, hidden):
    """Deterministic init mimicking nn.Linear (uniform +/- 1/sqrt(fan_in))."""
    ks = jax.random.split(key, 6)

    def lin(kw, kb, out_f, in_f):
        bound = 1.0 / jnp.sqrt(jnp.float32(in_f))
        w = jax.random.uniform(kw, (out_f, in_f), jnp.float32, -bound, bound)
        b = jax.random.uniform(kb, (out_f,), jnp.float32, -bound, bound)
        return w, b

    w1, b1 = lin(ks[0], ks[1], hidden, dim)
    wphi, bphi = lin(ks[2], ks[3], dim, hidden)
    wy, by = lin(ks[4], ks[5], 1, hidden)
    return {"w1": w1, "b1": b1, "wphi": wphi, "bphi": bphi, "wy": wy, "by": by}


def _reference_forward(x, p):
    h = jnp.maximum(x @ p["w1"].T + p["b1"], 0.0)
    return h @ p["wphi"].T + p["bphi"], h @ p["wy"].T + p["by"]


# TODO(synk): update_utilities / increment_ages / last_x / last_h are host-side
# training bookkeeping with no compute in forward; not implemented as kernels.

if __name__ == "__main__":
    B, dim, hidden = 20, 16, 100           # module default hidden_size=100
    key = jax.random.PRNGKey(0)
    kx, kp = jax.random.split(key)
    x = jax.random.normal(kx, (B, dim), jnp.float32)
    params = init_params(kp, dim, hidden)

    phi_ref, y_ref = _reference_forward(x, params)

    # f32 matmul path (near-bit-exact against the reference).
    prepared_f32 = prepare_params(params, weights_dtype=jnp.float32)
    phi_f32, y_f32 = network_u_forward(x, prepared_f32,
                                       compute_dtype=jnp.float32)
    jax.block_until_ready((phi_f32, y_f32))
    assert phi_f32.shape == (B, dim) and y_f32.shape == (B, 1)
    assert jnp.allclose(phi_f32, phi_ref, atol=1e-4, rtol=1e-4)
    assert jnp.allclose(y_f32, y_ref, atol=1e-4, rtol=1e-4)

    # Default bf16-operand path (v6e/v7x MXU); f32 accumulate + f32 epilogue.
    prepared_bf16 = prepare_params(params)          # bf16 weights by default
    phi_bf, y_bf = network_u_forward(x, prepared_bf16)
    jax.block_until_ready((phi_bf, y_bf))
    assert phi_bf.shape == (B, dim) and y_bf.shape == (B, 1)
    assert phi_bf.dtype == jnp.float32 and y_bf.dtype == jnp.float32
    assert jnp.allclose(phi_bf, phi_ref, atol=1e-1, rtol=1e-1)
    assert jnp.allclose(y_bf, y_ref, atol=1e-1, rtol=1e-1)

    print("KERNEL_OK")
</pallas_src>

<mosaic_0001>
module attributes {stable_mosaic.version = 11 : i64} {
  func.func @_network_u_kernel(%arg0: i32, %arg1: memref<16x16xf32, #tpu.memory_space<vmem>>, %arg2: memref<16x128xf32, #tpu.memory_space<vmem>>, %arg3: memref<1x128xf32, #tpu.memory_space<vmem>>, %arg4: memref<128x17xf32, #tpu.memory_space<vmem>>, %arg5: memref<1x17xf32, #tpu.memory_space<vmem>>, %arg6: memref<16x16xf32, #tpu.memory_space<vmem>>, %arg7: memref<16x1xf32, #tpu.memory_space<vmem>>) attributes {dimension_semantics = [#tpu.dimension_semantics<parallel>], iteration_bounds = array<i64: 2>, scalar_prefetch = 0 : i64, scratch_operands = 0 : i64, tpu.core_type = #tpu.core_type<tc>, window_params = [{transform_indices = @transform_0, window_bounds = array<i64: 16, 16>}, {pipeline_mode = #tpu.pipeline_mode<synchronous>, transform_indices = @transform_1, window_bounds = array<i64: 16, 128>}, {pipeline_mode = #tpu.pipeline_mode<synchronous>, transform_indices = @transform_2, window_bounds = array<i64: 1, 128>}, {pipeline_mode = #tpu.pipeline_mode<synchronous>, transform_indices = @transform_3, window_bounds = array<i64: 128, 17>}, {pipeline_mode = #tpu.pipeline_mode<synchronous>, transform_indices = @transform_4, window_bounds = array<i64: 1, 17>}, {transform_indices = @transform_5, window_bounds = array<i64: 16, 16>}, {transform_indices = @transform_6, window_bounds = array<i64: 16, 1>}]} {
    %c0 = arith.constant 0 : index
    %c0_0 = arith.constant 0 : index
    %0 = vector.load %arg1[%c0, %c0_0] : memref<16x16xf32, #tpu.memory_space<vmem>>, vector<16x16xf32>
    %c0_1 = arith.constant 0 : index
    %c0_2 = arith.constant 0 : index
    %1 = vector.load %arg2[%c0_1, %c0_2] : memref<16x128xf32, #tpu.memory_space<vmem>>, vector<16x128xf32>
    %cst = arith.constant dense<0.000000e+00> : vector<16x128xf32>
    %2 = tpu.matmul %0, %1, %cst {dimension_numbers = #tpu.dot_dimension_numbers<[1], [0], [0], [1], [0, 0, 1, 1], [], []>} : vector<16x16xf32>, vector<16x128xf32>, vector<16x128xf32> -> vector<16x128xf32>
    %c0_3 = arith.constant 0 : index
    %c0_4 = arith.constant 0 : index
    %3 = vector.load %arg3[%c0_3, %c0_4] : memref<1x128xf32, #tpu.memory_space<vmem>>, vector<1x128xf32>
    %4 = vector.broadcast %3 : vector<1x128xf32> to vector<16x128xf32>
    %5 = arith.addf %2, %4 : vector<16x128xf32>
    %cst_5 = arith.constant 0.000000e+00 : f32
    %6 = vector.broadcast %cst_5 : f32 to vector<16x128xf32>
    %7 = arith.maximumf %5, %6 : vector<16x128xf32>
    %c0_6 = arith.constant 0 : index
    %c0_7 = arith.constant 0 : index
    %8 = vector.load %arg4[%c0_6, %c0_7] : memref<128x17xf32, #tpu.memory_space<vmem>>, vector<128x17xf32>
    %cst_8 = arith.constant dense<0.000000e+00> : vector<16x17xf32>
    %9 = tpu.matmul %7, %8, %cst_8 {dimension_numbers = #tpu.dot_dimension_numbers<[1], [0], [0], [1], [0, 0, 1, 1], [], []>} : vector<16x128xf32>, vector<128x17xf32>, vector<16x17xf32> -> vector<16x17xf32>
    %c0_9 = arith.constant 0 : index
    %c0_10 = arith.constant 0 : index
    %10 = vector.load %arg5[%c0_9, %c0_10] : memref<1x17xf32, #tpu.memory_space<vmem>>, vector<1x17xf32>
    %11 = vector.broadcast %10 : vector<1x17xf32> to vector<16x17xf32>
    %12 = arith.addf %9, %11 : vector<16x17xf32>
    %13 = vector.extract_strided_slice %12 {offsets = [0, 0], sizes = [16, 16], strides = [1, 1]} : vector<16x17xf32> to vector<16x16xf32>
    %c0_11 = arith.constant 0 : index
    %c0_12 = arith.constant 0 : index
    %14 = vector.load %arg6[%c0_11, %c0_12] : memref<16x16xf32, #tpu.memory_space<vmem>>, vector<16x16xf32>
    tpu.vector_store %arg6[%c0_11, %c0_12], %13 {strides = array<i32>} : memref<16x16xf32, #tpu.memory_space<vmem>>, vector<16x16xf32>,
    %15 = vector.extract_strided_slice %12 {offsets = [0, 16], sizes = [16, 1], strides = [1, 1]} : vector<16x17xf32> to vector<16x1xf32>
    %c0_13 = arith.constant 0 : index
    %c0_14 = arith.constant 0 : index
    %16 = vector.load %arg7[%c0_13, %c0_14] : memref<16x1xf32, #tpu.memory_space<vmem>>, vector<16x1xf32>
    tpu.vector_store %arg7[%c0_13, %c0_14], %15 {strides = array<i32>} : memref<16x1xf32, #tpu.memory_space<vmem>>, vector<16x1xf32>,
    return
  }
  func.func @transform_0(%arg0: i32) -> (i32, i32) {
    %c0_i32 = arith.constant 0 : i32
    %c0_i32_0 = arith.constant 0 : i32
    return %arg0, %c0_i32 : i32, i32
  }
  func.func @transform_1(%arg0: i32) -> (i32, i32) {
    %c0_i32 = arith.constant 0 : i32
    %c0_i32_0 = arith.constant 0 : i32
    %c0_i32_1 = arith.constant 0 : i32
    return %c0_i32, %c0_i32_0 : i32, i32
  }
  func.func @transform_2(%arg0: i32) -> (i32, i32) {
    %c0_i32 = arith.constant 0 : i32
    %c0_i32_0 = arith.constant 0 : i32
    %c0_i32_1 = arith.constant 0 : i32
    return %c0_i32, %c0_i32_0 : i32, i32
  }
  func.func @transform_3(%arg0: i32) -> (i32, i32) {
    %c0_i32 = arith.constant 0 : i32
    %c0_i32_0 = arith.constant 0 : i32
    %c0_i32_1 = arith.constant 0 : i32
    return %c0_i32, %c0_i32_0 : i32, i32
  }
  func.func @transform_4(%arg0: i32) -> (i32, i32) {
    %c0_i32 = arith.constant 0 : i32
    %c0_i32_0 = arith.constant 0 : i32
    %c0_i32_1 = arith.constant 0 : i32
    return %c0_i32, %c0_i32_0 : i32, i32
  }
  func.func @transform_5(%arg0: i32) -> (i32, i32) {
    %c0_i32 = arith.constant 0 : i32
    %c0_i32_0 = arith.constant 0 : i32
    return %arg0, %c0_i32 : i32, i32
  }
  func.func @transform_6(%arg0: i32) -> (i32, i32) {
    %c0_i32 = arith.constant 0 : i32
    %c0_i32_0 = arith.constant 0 : i32
    return %arg0, %c0_i32 : i32, i32
  }
}

</mosaic_0001>

<llo_original>
// kernel: network_u_forward.1
$region0: #{network_u_forward.1}
  #allocation0 [shape = 'u32[]', space=smem, size = 0x4, offset = 0x4, fixed_abs, tag = 'smem constant byte address 0x4 - core index']
  #allocation1 [shape = 'u32[72,128]{1,0:T(1,128)}', space=vmem, size = 0x9000, scoped, tag = 'internal scratch']
  %s0 = inlined_call_operand.vmem [shape: f32[32,16], index: 0, kind: input, shape index: {}]
  %s1 = inlined_call_operand.vmem [shape: f32[16,128], index: 1, kind: input, shape index: {}]
  %s2 = inlined_call_operand.vmem [shape: f32[1,128], index: 2, kind: input, shape index: {}]
  %s3 = inlined_call_operand.vmem [shape: f32[128,17], index: 3, kind: input, shape index: {}]
  %s4 = inlined_call_operand.vmem [shape: f32[1,17], index: 4, kind: input, shape index: {}]
  %s5 = inlined_call_operand.vmem [shape: f32[32,16], index: 5, kind: output, shape index: {0}]
  %s6 = inlined_call_operand.vmem [shape: f32[32,1], index: 6, kind: output, shape index: {1}]
  %7 = xla_tuple %s5, %s6
  %s8 = sld [smem:[#allocation0]]
  $region61: #{network_u_forward.1} parent=0
    _
  %s10 = ssub.s32 1, %s8
  %s11 = scalar_select 0, %s10, %s8
  loop: start=0, step=1, limit=4
  $region2: #{network_u_forward.1} parent=0 // loop_pre_header
    _
  $region3: #{network_u_forward.1} parent=0 // loop_header
    %s13 = sphi 0, %s17
    %p14 = scmp.ge.s32.totalorder %s13, 4
    %s23 = sphi 0, %s25
    %s26 = sphi 0, %s23
    %s27 = sphi 0, %s26
    %s43 = sphi 0, %s27
    %s47 = sphi 0, %s47
    %s49 = sphi 0, %s47
    %s50 = sphi 0, %s49
    %s64 = sphi 0, %s50
    %s68 = sphi 0, %s68
    %s70 = sphi 0, %s68
    %s71 = sphi 0, %s70
    %s85 = sphi 0, %s71
    %s89 = sphi 0, %s89
    %s91 = sphi 0, %s89
    %s92 = sphi 0, %s91
    %s106 = sphi 0, %s92
    %s110 = sphi 0, %s110
    %s112 = sphi 0, %s110
    %s113 = sphi 0, %s112
    %s127 = sphi 0, %s113
    %s133 = sphi 0, %s135
    %s136 = sphi 0, %s133
    %s137 = sphi 0, %s136
    %s153 = sphi 0, %s137
    %s159 = sphi 0, %s161
    %s162 = sphi 0, %s159
    %s163 = sphi 0, %s162
    %s179 = sphi 0, %s163
  $region4: #{network_u_forward.1} parent=0 // loop_header_branch
    %16 = sbr.rel (%p14) target = $region8
  $region5: #{network_u_forward.1} parent=0 // loop_body
    %s18 = ssub.s32 %s13, 1
    %s19 = ssub.s32 %s13, 2
    %s20 = sadd.s32 %s13, 1
    %s21 = ssub.s32 %s13, %s20
    %p22 = scmp.eq.s32.totalorder %s21, 0
    %s24 = sadd.s32 %s23, 1
    %s25 = scalar_select %p22, %s23, %s24
    %p28 = pneg %p22
    %p29 = scmp.eq.s32.totalorder %s13, 1
    %p30 = por %p28, %p29
    %p31 = scmp.ne.s32.totalorder %s23, %s26
    %p32 = scmp.eq.s32.totalorder %s13, 0
    %p33 = por %p31, %p32
    %p34 = scmp.ne.s32.totalorder %s23, %s26
    %p35 = scmp.eq.s32.totalorder %s18, 1
    %p36 = por %p34, %p35
    %p37 = scmp.ne.s32.totalorder %s26, %s27
    %p38 = scmp.eq.s32.totalorder %s18, 0
    %p39 = por %p37, %p38
    %p40 = scmp.ne.s32.totalorder %s26, %s27
    %p41 = scmp.eq.s32.totalorder %s19, 1
    %p42 = por %p40, %p41
    %p44 = scmp.ne.s32.totalorder %s27, %s43
    %p45 = scmp.eq.s32.totalorder %s19, 0
    %p46 = por %p44, %p45
    %s48 = sadd.s32 %s47, 1
    %p51 = scmp.eq.s32.totalorder %s13, 1
    %p52 = scmp.ne.s32.totalorder %s47, %s49
    %p53 = scmp.eq.s32.totalorder %s13, 0
    %p54 = por %p52, %p53
    %p55 = scmp.ne.s32.totalorder %s47, %s49
    %p56 = scmp.eq.s32.totalorder %s18, 1
    %p57 = por %p55, %p56
    %p58 = scmp.ne.s32.totalorder %s49, %s50
    %p59 = scmp.eq.s32.totalorder %s18, 0
    %p60 = por %p58, %p59
    %p61 = scmp.ne.s32.totalorder %s49, %s50
    %p62 = scmp.eq.s32.totalorder %s19, 1
    %p63 = por %p61, %p62
    %p65 = scmp.ne.s32.totalorder %s50, %s64
    %p66 = scmp.eq.s32.totalorder %s19, 0
    %p67 = por %p65, %p66
    %s69 = sadd.s32 %s68, 1
    %p72 = scmp.eq.s32.totalorder %s13, 1
    %p73 = scmp.ne.s32.totalorder %s68, %s70
    %p74 = scmp.eq.s32.totalorder %s13, 0
    %p75 = por %p73, %p74
    %p76 = scmp.ne.s32.totalorder %s68, %s70
    %p77 = scmp.eq.s32.totalorder %s18, 1
    %p78 = por %p76, %p77
    %p79 = scmp.ne.s32.totalorder %s70, %s71
    %p80 = scmp.eq.s32.totalorder %s18, 0
    %p81 = por %p79, %p80
    %p82 = scmp.ne.s32.totalorder %s70, %s71
    %p83 = scmp.eq.s32.totalorder %s19, 1
    %p84 = por %p82, %p83
    %p86 = scmp.ne.s32.totalorder %s71, %s85
    %p87 = scmp.eq.s32.totalorder %s19, 0
    %p88 = por %p86, %p87
    %s90 = sadd.s32 %s89, 1
    %p93 = scmp.eq.s32.totalorder %s13, 1
    %p94 = scmp.ne.s32.totalorder %s89, %s91
    %p95 = scmp.eq.s32.totalorder %s13, 0
    %p96 = por %p94, %p95
    %p97 = scmp.ne.s32.totalorder %s89, %s91
    %p98 = scmp.eq.s32.totalorder %s18, 1
    %p99 = por %p97, %p98
    %p100 = scmp.ne.s32.totalorder %s91, %s92
    %p101 = scmp.eq.s32.totalorder %s18, 0
    %p102 = por %p100, %p101
    %p103 = scmp.ne.s32.totalorder %s91, %s92
    %p104 = scmp.eq.s32.totalorder %s19, 1
    %p105 = por %p103, %p104
    %p107 = scmp.ne.s32.totalorder %s92, %s106
    %p108 = scmp.eq.s32.totalorder %s19, 0
    %p109 = por %p107, %p108
    %s111 = sadd.s32 %s110, 1
    %p114 = scmp.eq.s32.totalorder %s13, 1
    %p115 = scmp.ne.s32.totalorder %s110, %s112
    %p116 = scmp.eq.s32.totalorder %s13, 0
    %p117 = por %p115, %p116
    %p118 = scmp.ne.s32.totalorder %s110, %s112
    %p119 = scmp.eq.s32.totalorder %s18, 1
    %p120 = por %p118, %p119
    %p121 = scmp.ne.s32.totalorder %s112, %s113
    %p122 = scmp.eq.s32.totalorder %s18, 0
    %p123 = por %p121, %p122
    %p124 = scmp.ne.s32.totalorder %s112, %s113
    %p125 = scmp.eq.s32.totalorder %s19, 1
    %p126 = por %p124, %p125
    %p128 = scmp.ne.s32.totalorder %s113, %s127
    %p129 = scmp.eq.s32.totalorder %s19, 0
    %p130 = por %p128, %p129
    %s131 = ssub.s32 %s13, %s20
    %p132 = scmp.eq.s32.totalorder %s131, 0
    %s134 = sadd.s32 %s133, 1
    %s135 = scalar_select %p132, %s133, %s134
    %p138 = pneg %p132
    %p139 = scmp.eq.s32.totalorder %s13, 1
    %p140 = por %p138, %p139
    %p141 = scmp.ne.s32.totalorder %s133, %s136
    %p142 = scmp.eq.s32.totalorder %s13, 0
    %p143 = por %p141, %p142
    %p144 = scmp.ne.s32.totalorder %s133, %s136
    %p145 = scmp.eq.s32.totalorder %s18, 1
    %p146 = por %p144, %p145
    %p147 = scmp.ne.s32.totalorder %s136, %s137
    %p148 = scmp.eq.s32.totalorder %s18, 0
    %p149 = por %p147, %p148
    %p150 = scmp.ne.s32.totalorder %s136, %s137
    %p151 = scmp.eq.s32.totalorder %s19, 1
    %p152 = por %p150, %p151
    %p154 = scmp.ne.s32.totalorder %s137, %s153
    %p155 = scmp.eq.s32.totalorder %s19, 0
    %p156 = por %p154, %p155
    %s157 = ssub.s32 %s13, %s20
    %p158 = scmp.eq.s32.totalorder %s157, 0
    %s160 = sadd.s32 %s159, 1
    %s161 = scalar_select %p158, %s159, %s160
    %p164 = pneg %p158
    %p165 = scmp.eq.s32.totalorder %s13, 1
    %p166 = por %p164, %p165
    %p167 = scmp.ne.s32.totalorder %s159, %s162
    %p168 = scmp.eq.s32.totalorder %s13, 0
    %p169 = por %p167, %p168
    %p170 = scmp.ne.s32.totalorder %s159, %s162
    %p171 = scmp.eq.s32.totalorder %s18, 1
    %p172 = por %p170, %p171
    %p173 = scmp.ne.s32.totalorder %s162, %s163
    %p174 = scmp.eq.s32.totalorder %s18, 0
    %p175 = por %p173, %p174
    %p176 = scmp.ne.s32.totalorder %s162, %s163
    %p177 = scmp.eq.s32.totalorder %s19, 1
    %p178 = por %p176, %p177
    %p180 = scmp.ne.s32.totalorder %s163, %s179
    %p181 = scmp.eq.s32.totalorder %s19, 0
    %p182 = por %p180, %p181
    %p183 = scmp.le.s32.totalorder 1, %s13
    %p184 = scmp.lt.s32.totalorder %s13, 3
    %p185 = pnand %p183, %p184
    %p186 = pneg %p185
    // Predicated region
    $region9: #{network_u_forward.1} parent=5 // pred_check
      _
    $region10: #{network_u_forward.1} parent=5 // pred_check_branch
      %188 = sbr.rel (%p185) target = $region12
    $region11: #{network_u_forward.1} parent=5 // pred_region
      %s189 = ssub.s32 %s13, 1
      // Predicated region
      $region13: #{network_u_forward.1} parent=11 // pred_check
        %p190 = pneg %p60
      $region14: #{network_u_forward.1} parent=11 // pred_check_branch
        %192 = sbr.rel (%p190) target = $region16
      $region15: #{network_u_forward.1} parent=11 // pred_region
        _
      $region16: #{network_u_forward.1} parent=11 // pred_fallthru
        _
      // Predicated region
      $region17: #{network_u_forward.1} parent=11 // pred_check
        %p193 = pneg %p81
      $region18: #{network_u_forward.1} parent=11 // pred_check_branch
        %195 = sbr.rel (%p193) target = $region20
      $region19: #{network_u_forward.1} parent=11 // pred_region
        _
      $region20: #{network_u_forward.1} parent=11 // pred_fallthru
        _
      // Predicated region
      $region21: #{network_u_forward.1} parent=11 // pred_check
        %p196 = pneg %p102
      $region22: #{network_u_forward.1} parent=11 // pred_check_branch
        %198 = sbr.rel (%p196) target = $region24
      $region23: #{network_u_forward.1} parent=11 // pred_region
        _
      $region24: #{network_u_forward.1} parent=11 // pred_fallthru
        _
      // Predicated region
      $region25: #{network_u_forward.1} parent=11 // pred_check
        %p199 = pneg %p123
      $region26: #{network_u_forward.1} parent=11 // pred_check_branch
        %201 = sbr.rel (%p199) target = $region28
      $region27: #{network_u_forward.1} parent=11 // pred_region
        _
      $region28: #{network_u_forward.1} parent=11 // pred_fallthru
        _
    $region12: #{network_u_forward.1} parent=5 // pred_fallthru
      _
    %p202 = scmp.lt.s32.totalorder %s13, 2
    // Predicated region
    $region29: #{network_u_forward.1} parent=5 // pred_check
      %p203 = pneg %p202
    $region30: #{network_u_forward.1} parent=5 // pred_check_branch
      %205 = sbr.rel (%p203) target = $region32
    $region31: #{network_u_forward.1} parent=5 // pred_region
      // Predicated region
      $region33: #{network_u_forward.1} parent=31 // pred_check
        %p206 = pneg %p33
      $region34: #{network_u_forward.1} parent=31 // pred_check_branch
        %208 = sbr.rel (%p206) target = $region36
      $region35: #{network_u_forward.1} parent=31 // pred_region
        %s209 = smul.u32 2, %s13
        %p210 = scmp.lt.s32.totalorder %s209, 3
        %s211 = scalar_select %p210, %s209, 3
        %s212 = smul.addr %s211, 8
        %s213 = scalar_lea.vmem %s0, %s212
        %s214 = smul.u32 2, %s13
      $region36: #{network_u_forward.1} parent=31 // pred_fallthru
        _
    $region32: #{network_u_forward.1} parent=5 // pred_fallthru
      _
    %p215 = scmp.le.s32.totalorder 1, %s13
    %p216 = scmp.lt.s32.totalorder %s13, 3
    %p217 = pnand %p215, %p216
    %p218 = pneg %p217
    // Predicated region
    $region37: #{network_u_forward.1} parent=5 // pred_check
      _
    $region38: #{network_u_forward.1} parent=5 // pred_check_branch
      %220 = sbr.rel (%p217) target = $region40
    $region39: #{network_u_forward.1} parent=5 // pred_region
      %s221 = ssub.s32 %s13, 1
      %s222 = smul.u32 2, %s18
      %p223 = scmp.lt.s32.totalorder %s222, 3
      %s224 = scalar_select %p223, %s222, 3
      %s225 = smul.addr %s224, 8
      %s226 = scalar_lea.vmem %s0, %s225
      %p227 = pneg %p39
      %p228 = pneg %p36
      %p229 = pneg %p60
      %p230 = pneg %p57
      %p231 = pneg %p81
      %p232 = pneg %p78
      %p233 = pneg %p102
      %p234 = pneg %p99
      %p235 = pneg %p123
      %p236 = pneg %p120
      %p237 = pneg %p149
      %p238 = pneg %p146
      %s239 = smul.u32 2, %s18
      %p240 = scmp.lt.s32.totalorder %s239, 3
      %s241 = scalar_select %p240, %s239, 3
      %s242 = smul.addr %s241, 8
      %s243 = scalar_lea.vmem %s5, %s242
      %p244 = pneg %p175
      %p245 = pneg %p172
      %s246 = smul.u32 2, %s18
      %p247 = scmp.lt.s32.totalorder %s246, 3
      %s248 = scalar_select %p247, %s246, 3
      %s249 = smul.addr %s248, 8
      %s250 = scalar_lea.vmem %s6, %s249
      %s251 = smul.u32 2, %s18
      %p252 = scmp.lt.s32.totalorder %s251, 3
      %s253 = scalar_select %p252, %s251, 3
      %s254 = smul.addr %s253, 8
      %s255 = scalar_lea.vmem %s0, %s254
      %s256 = smul.u32 2, %s18
      %s257 = smul.u32 2, %s18
      %p258 = scmp.lt.s32.totalorder %s257, 3
      %s259 = scalar_select %p258, %s257, 3
      %s260 = smul.addr %s259, 8
      %s261 = scalar_lea.vmem %s5, %s260
      %s262 = smul.u32 2, %s18
      %s263 = smul.u32 2, %s18
      %p264 = scmp.lt.s32.totalorder %s263, 3
      %s265 = scalar_select %p264, %s263, 3
      %s266 = smul.addr %s265, 8
      %s267 = scalar_lea.vmem %s6, %s266
      %s268 = smul.u32 2, %s18
      %v269 = vld [vmem:[%s255] sm:$0xff]
      %v270 = vld [vmem:[%s255 + $0x8] sm:$0xff]
      %v271 = vld [vmem:[%s1] sm:$0xff]
      %v272 = vld [vmem:[%s1 + $0x8] sm:$0xff]
      %v273 = vld [vmem:[%s2] sm:$0x1]
      %v275 = vperm.slane %v273, 0
      %vm277 = vcmask 130048
      %v279 = vsel %vm277, %v269, 0
      %v282 = vsel %vm277, %v270, 0
      %284 = vmatpush.msra.mxu0 0.0
      %285 = vmatpush.msra.mxu0 0.0
      %286 = vmatpush.msra.mxu0 0.0
      %287 = vmatpush.msra.mxu0 0.0
      %288 = vmatpush.msra.mxu0 0.0
      %289 = vmatpush.msra.mxu0 0.0
      %290 = vmatpush.msra.mxu0 0.0
      %291 = vmatpush.msra.mxu0 0.0
      %292 = vmatpush.msra.mxu0 0.0
      %293 = vmatpush.msra.mxu0 0.0
      %294 = vmatpush.msra.mxu0 0.0
      %295 = vmatpush.msra.mxu0 0.0
      %296 = vmatpush.msra.mxu0 0.0
      %297 = vmatpush.msra.mxu0 0.0
      %298 = vmatpush.msra.mxu0 %v272
      %299 = vmatpush.msra.mxu0 %v271
      %300 = vmatmul.f32.gmra.mxu0 %v279
      %v301 = vpop.f32.mrf.mxu0
      %v302 = vadd.f32 %v275, %v301
      %303 = vmatmul.f32.gmra.mxu0 %v282
      %v304 = vpop.f32.mrf.mxu0
      %v305 = vadd.f32 %v275, %v304
      %306 = vdwg.mxu0
      %v307 = vmax.f32 %v302, 0.0
      %v308 = vmax.f32 %v305, 0.0
      %v309 = vld [vmem:[%s3] sm:$0xff]
      %v310 = vld [vmem:[%s3 + $0x8] sm:$0xff]
      %v311 = vld [vmem:[%s3 + $0x10] sm:$0xff]
      %v312 = vld [vmem:[%s3 + $0x18] sm:$0xff]
      %v313 = vld [vmem:[%s3 + $0x20] sm:$0xff]
      %v314 = vld [vmem:[%s3 + $0x28] sm:$0xff]
      %v315 = vld [vmem:[%s3 + $0x30] sm:$0xff]
      %v316 = vld [vmem:[%s3 + $0x38] sm:$0xff]
      %v317 = vld [vmem:[%s3 + $0x40] sm:$0xff]
      %v318 = vld [vmem:[%s3 + $0x48] sm:$0xff]
      %v319 = vld [vmem:[%s3 + $0x50] sm:$0xff]
      %v320 = vld [vmem:[%s3 + $0x58] sm:$0xff]
      %v321 = vld [vmem:[%s3 + $0x60] sm:$0xff]
      %v322 = vld [vmem:[%s3 + $0x68] sm:$0xff]
      %v323 = vld [vmem:[%s3 + $0x70] sm:$0xff]
      %v324 = vld [vmem:[%s3 + $0x78] sm:$0xff]
      %v325 = vld [vmem:[%s4] sm:$0x1]
      %v327 = vperm.slane %v325, 0
      %329 = vmatpush.msra.mxu0 %v324
      %330 = vmatpush.msra.mxu0 %v323
      %331 = vmatpush.msra.mxu0 %v322
      %332 = vmatpush.msra.mxu0 %v321
      %333 = vmatpush.msra.mxu0 %v320
      %334 = vmatpush.msra.mxu0 %v319
      %335 = vmatpush.msra.mxu0 %v318
      %336 = vmatpush.msra.mxu0 %v317
      %337 = vmatpush.msra.mxu0 %v316
      %338 = vmatpush.msra.mxu0 %v315
      %339 = vmatpush.msra.mxu0 %v314
      %340 = vmatpush.msra.mxu0 %v313
      %341 = vmatpush.msra.mxu0 %v312
      %342 = vmatpush.msra.mxu0 %v311
      %343 = vmatpush.msra.mxu0 %v310
      %344 = vmatpush.msra.mxu0 %v309
      %345 = vmatmul.f32.gmra.mxu0 %v307
      %v346 = vpop.f32.mrf.mxu0
      %v347 = vadd.f32 %v327, %v346
      %348 = vmatmul.f32.gmra.mxu0 %v308
      %v349 = vpop.f32.mrf.mxu0
      %v350 = vadd.f32 %v327, %v349
      %351 = vdwg.mxu0
      %352 = vst.msk [vmem:[%s261] sm:$0xff] %vm277, %v347
      %353 = vst.msk [vmem:[%s261 + $0x8] sm:$0xff] %vm277, %v350
      %356 = vrot.lane.b32.xlu0 %v347, 112
      %v357 = vpop.permute.xlu0 %356
      %358 = vrot.lane.b32.xlu0 %v350, 112
      %v359 = vpop.permute.xlu0 %358
      %vm362 = vcmask 7168
      %363 = vst.msk [vmem:[%s267] sm:$0xff] %vm362, %v357
      %364 = vst.msk [vmem:[%s267 + $0x8] sm:$0xff] %vm362, %v359
      %s365 = smul.u32 2, %s18
      %p366 = scmp.lt.s32.totalorder %s365, 3
      %s367 = scalar_select %p366, %s365, 3
      %s368 = smul.addr %s367, 8
      %s369 = scalar_lea.vmem %s5, %s368
      %s370 = smul.u32 2, %s18
      %p371 = scmp.lt.s32.totalorder %s370, 3
      %s372 = scalar_select %p371, %s370, 3
      %s373 = smul.addr %s372, 8
      %s374 = scalar_lea.vmem %s6, %s373
      // Predicated region
      $region41: #{network_u_forward.1} parent=39 // pred_check
        %p375 = pneg %p146
      $region42: #{network_u_forward.1} parent=39 // pred_check_branch
        %377 = sbr.rel (%p375) target = $region44
      $region43: #{network_u_forward.1} parent=39 // pred_region
        %s378 = smul.u32 2, %s18
      $region44: #{network_u_forward.1} parent=39 // pred_fallthru
        _
      // Predicated region
      $region45: #{network_u_forward.1} parent=39 // pred_check
        %p379 = pneg %p172
      $region46: #{network_u_forward.1} parent=39 // pred_check_branch
        %381 = sbr.rel (%p379) target = $region48
      $region47: #{network_u_forward.1} parent=39 // pred_region
        %s382 = smul.u32 2, %s18
      $region48: #{network_u_forward.1} parent=39 // pred_fallthru
        _
    $region40: #{network_u_forward.1} parent=5 // pred_fallthru
      _
    %p383 = scmp.le.s32.totalorder 2, %s13
    // Predicated region
    $region49: #{network_u_forward.1} parent=5 // pred_check
      %p384 = pneg %p383
    $region50: #{network_u_forward.1} parent=5 // pred_check_branch
      %386 = sbr.rel (%p384) target = $region52
    $region51: #{network_u_forward.1} parent=5 // pred_region
      %s387 = ssub.s32 %s13, 2
      // Predicated region
      $region53: #{network_u_forward.1} parent=51 // pred_check
        %p388 = pneg %p152
      $region54: #{network_u_forward.1} parent=51 // pred_check_branch
        %390 = sbr.rel (%p388) target = $region56
      $region55: #{network_u_forward.1} parent=51 // pred_region
        %s391 = smul.u32 2, %s19
        %p392 = scmp.lt.s32.totalorder %s391, 3
        %s393 = scalar_select %p392, %s391, 3
        %s394 = smul.addr %s393, 8
        %s395 = scalar_lea.vmem %s5, %s394
      $region56: #{network_u_forward.1} parent=51 // pred_fallthru
        _
      // Predicated region
      $region57: #{network_u_forward.1} parent=51 // pred_check
        %p396 = pneg %p178
      $region58: #{network_u_forward.1} parent=51 // pred_check_branch
        %398 = sbr.rel (%p396) target = $region60
      $region59: #{network_u_forward.1} parent=51 // pred_region
        %s399 = smul.u32 2, %s19
        %p400 = scmp.lt.s32.totalorder %s399, 3
        %s401 = scalar_select %p400, %s399, 3
        %s402 = smul.addr %s401, 8
        %s403 = scalar_lea.vmem %s6, %s402
      $region60: #{network_u_forward.1} parent=51 // pred_fallthru
        _
    $region52: #{network_u_forward.1} parent=5 // pred_fallthru
      _
  $region6: #{network_u_forward.1} parent=0 // loop_footer
    %s17 = sadd.s32 1, %s13
  $region7: #{network_u_forward.1} parent=0 // loop_footer_branch
    %12 = sbr.rel target = $region3
  $region8: #{network_u_forward.1} parent=0 // loop_exit
    _

</llo_original>
